<compile_context>
chip_gen: v5e
topology: v5e:2x2
jax: 0.10.0
libtpu: 0.0.40
codegen_flags: <defaults>
</compile_context>

<pallas_src>
import functools

import jax
import jax.numpy as jnp
from jax.experimental import pallas as pl
from jax.experimental.pallas import tpu as pltpu


def _kv_gather_kernel(idx_ref, kv_ref, out_ref, *, p2, topk, w2c):
    # idx_ref: (block_n, p2, topk) int32   VMEM
    # kv_ref : (block_n, p2, w2c)          VMEM
    # out_ref: (block_n, p2, topk * w2c)   VMEM
    block_n = idx_ref.shape[0]
    cols = jax.lax.broadcasted_iota(jnp.int32, (p2, p2), 1)  # hoisted constant

    for b in range(block_n):          # static unroll over batch-per-block
        kv_b = kv_ref[b]              # (p2, w2c)
        ids_b = idx_ref[b]            # (p2, topk)
        for t in range(topk):         # static unroll, topk is small
            ids_t = jax.lax.slice(ids_b, (0, t), (p2, t + 1))      # (p2, 1)
            onehot = (ids_t == cols).astype(kv_b.dtype)            # (p2, p2)
            # Contract on the p2 axis directly (no explicit transpose).
            gathered = jax.lax.dot_general(
                onehot, kv_b,
                dimension_numbers=(((1,), (0,)), ((), ())),
                preferred_element_type=jnp.float32)                # (p2, w2c)
            # Static, aligned, lane-dense slab store.
            out_ref[b, :, t * w2c:(t + 1) * w2c] = gathered.astype(out_ref.dtype)


def kv_gather(r_idx, r_weight, kv, *, block_n=1):
    """r_idx/r_weight: (n, p2, topk); kv: (n, p2, w2, c_kv).
    Returns (n, p2, topk, w2, c_kv), matching KVGather.forward."""
    n, p2, w2, c_kv = kv.shape
    topk = r_idx.shape[-1]
    assert r_idx.shape == (n, p2, topk)
    del r_weight  # forward() ignores r_weight (gather only; mul_weight='none')
    assert n % block_n == 0, "block_n must divide n"

    w2c = w2 * c_kv
    kv_flat = kv.reshape(n, p2, w2c)  # row-major flatten of (w2, c_kv)

    kernel = functools.partial(_kv_gather_kernel, p2=p2, topk=topk, w2c=w2c)

    out_flat = pl.pallas_call(
        kernel,
        out_shape=jax.ShapeDtypeStruct((n, p2, topk * w2c), kv.dtype),
        grid_spec=pltpu.PrefetchScalarGridSpec(
            num_scalar_prefetch=0,
            grid=(n // block_n,),
            in_specs=[
                pl.BlockSpec((block_n, p2, topk), lambda b: (b, 0, 0)),
                pl.BlockSpec((block_n, p2, w2c), lambda b: (b, 0, 0)),
            ],
            out_specs=pl.BlockSpec((block_n, p2, topk * w2c), lambda b: (b, 0, 0)),
        ),
        compiler_params=pltpu.CompilerParams(
            dimension_semantics=("parallel",)),
    )(r_idx.astype(jnp.int32), kv_flat)

    # Pure row-major reshape back to the module's output layout (free).
    return out_flat.reshape(n, p2, topk, w2, c_kv)


if __name__ == "__main__":
    # Small shapes consistent with the module: n=2, p^2=16 regions,
    # w^2=16 tokens per region, c_kv = c_qk + c_v = 64, topk=4.
    n, p2, w2, c_kv, topk = 2, 16, 16, 64, 4

    key0 = jax.random.PRNGKey(0)
    k_idx, k_w, k_kv = jax.random.split(key0, 3)

    r_idx = jax.random.randint(k_idx, (n, p2, topk), 0, p2, dtype=jnp.int32)
    r_weight = jax.nn.softmax(
        jax.random.normal(k_w, (n, p2, topk), dtype=jnp.float32), axis=-1)
    kv = jax.random.normal(k_kv, (n, p2, w2, c_kv), dtype=jnp.float32)

    out = kv_gather(r_idx, r_weight, kv)
    jax.block_until_ready(out)

    # Pure-JAX reference of torch.gather semantics.
    ref = jax.vmap(lambda kv_b, idx_b: kv_b[idx_b])(kv, r_idx)  # (n,p2,topk,w2,c_kv)
    assert out.shape == (n, p2, topk, w2, c_kv), "shape mismatch"
    assert jnp.allclose(out, ref, atol=1e-6, rtol=1e-6), "gather mismatch"

    print("KERNEL_OK")
</pallas_src>

<mosaic_0001>
module attributes {stable_mosaic.version = 11 : i64} {
  func.func @_kv_gather_kernel(%arg0: i32, %arg1: memref<1x16x4xi32, #tpu.memory_space<vmem>>, %arg2: memref<1x16x1024xf32, #tpu.memory_space<vmem>>, %arg3: memref<1x16x4096xf32, #tpu.memory_space<vmem>>) attributes {dimension_semantics = [#tpu.dimension_semantics<parallel>], iteration_bounds = array<i64: 2>, scalar_prefetch = 0 : i64, scratch_operands = 0 : i64, tpu.core_type = #tpu.core_type<tc>, window_params = [{transform_indices = @transform_0, window_bounds = array<i64: 1, 16, 4>}, {transform_indices = @transform_1, window_bounds = array<i64: 1, 16, 1024>}, {transform_indices = @transform_2, window_bounds = array<i64: 1, 16, 4096>}]} {
    %0 = tpu.iota {dimensions = array<i32: 1>} : vector<16x16xi32>
    %c0 = arith.constant 0 : index
    %c0_0 = arith.constant 0 : index
    %c0_1 = arith.constant 0 : index
    %1 = vector.load %arg2[%c0, %c0_0, %c0_1] : memref<1x16x1024xf32, #tpu.memory_space<vmem>>, vector<1x16x1024xf32>
    %2 = vector.shape_cast %1 : vector<1x16x1024xf32> to vector<16x1024xf32>
    %c0_2 = arith.constant 0 : index
    %c0_3 = arith.constant 0 : index
    %c0_4 = arith.constant 0 : index
    %3 = vector.load %arg1[%c0_2, %c0_3, %c0_4] : memref<1x16x4xi32, #tpu.memory_space<vmem>>, vector<1x16x4xi32>
    %4 = vector.shape_cast %3 : vector<1x16x4xi32> to vector<16x4xi32>
    %5 = vector.extract_strided_slice %4 {offsets = [0, 0], sizes = [16, 1], strides = [1, 1]} : vector<16x4xi32> to vector<16x1xi32>
    %6 = vector.broadcast %5 : vector<16x1xi32> to vector<16x16xi32>
    %7 = arith.cmpi eq, %6, %0 : vector<16x16xi32>
    %8 = arith.extui %7 : vector<16x16xi1> to vector<16x16xi32>
    %9 = arith.sitofp %8 : vector<16x16xi32> to vector<16x16xf32>
    %cst = arith.constant dense<0.000000e+00> : vector<16x1024xf32>
    %10 = tpu.matmul %9, %2, %cst {dimension_numbers = #tpu.dot_dimension_numbers<[1], [0], [0], [1], [0, 0, 1, 1], [], []>} : vector<16x16xf32>, vector<16x1024xf32>, vector<16x1024xf32> -> vector<16x1024xf32>
    %c0_5 = arith.constant 0 : index
    %c0_6 = arith.constant 0 : index
    %c0_7 = arith.constant 0 : index
    %11 = vector.load %arg3[%c0_5, %c0_6, %c0_7] : memref<1x16x4096xf32, #tpu.memory_space<vmem>>, vector<1x16x1024xf32>
    %12 = vector.shape_cast %11 : vector<1x16x1024xf32> to vector<16x1024xf32>
    %13 = vector.shape_cast %10 : vector<16x1024xf32> to vector<1x16x1024xf32>
    tpu.vector_store %arg3[%c0_5, %c0_6, %c0_7], %13 {strides = array<i32>} : memref<1x16x4096xf32, #tpu.memory_space<vmem>>, vector<1x16x1024xf32>,
    %14 = vector.extract_strided_slice %4 {offsets = [0, 1], sizes = [16, 1], strides = [1, 1]} : vector<16x4xi32> to vector<16x1xi32>
    %15 = vector.broadcast %14 : vector<16x1xi32> to vector<16x16xi32>
    %16 = arith.cmpi eq, %15, %0 : vector<16x16xi32>
    %17 = arith.extui %16 : vector<16x16xi1> to vector<16x16xi32>
    %18 = arith.sitofp %17 : vector<16x16xi32> to vector<16x16xf32>
    %cst_8 = arith.constant dense<0.000000e+00> : vector<16x1024xf32>
    %19 = tpu.matmul %18, %2, %cst_8 {dimension_numbers = #tpu.dot_dimension_numbers<[1], [0], [0], [1], [0, 0, 1, 1], [], []>} : vector<16x16xf32>, vector<16x1024xf32>, vector<16x1024xf32> -> vector<16x1024xf32>
    %c0_9 = arith.constant 0 : index
    %c0_10 = arith.constant 0 : index
    %c1024 = arith.constant 1024 : index
    %20 = vector.load %arg3[%c0_9, %c0_10, %c1024] : memref<1x16x4096xf32, #tpu.memory_space<vmem>>, vector<1x16x1024xf32>
    %21 = vector.shape_cast %20 : vector<1x16x1024xf32> to vector<16x1024xf32>
    %22 = vector.shape_cast %19 : vector<16x1024xf32> to vector<1x16x1024xf32>
    tpu.vector_store %arg3[%c0_9, %c0_10, %c1024], %22 {strides = array<i32>} : memref<1x16x4096xf32, #tpu.memory_space<vmem>>, vector<1x16x1024xf32>,
    %23 = vector.extract_strided_slice %4 {offsets = [0, 2], sizes = [16, 1], strides = [1, 1]} : vector<16x4xi32> to vector<16x1xi32>
    %24 = vector.broadcast %23 : vector<16x1xi32> to vector<16x16xi32>
    %25 = arith.cmpi eq, %24, %0 : vector<16x16xi32>
    %26 = arith.extui %25 : vector<16x16xi1> to vector<16x16xi32>
    %27 = arith.sitofp %26 : vector<16x16xi32> to vector<16x16xf32>
    %cst_11 = arith.constant dense<0.000000e+00> : vector<16x1024xf32>
    %28 = tpu.matmul %27, %2, %cst_11 {dimension_numbers = #tpu.dot_dimension_numbers<[1], [0], [0], [1], [0, 0, 1, 1], [], []>} : vector<16x16xf32>, vector<16x1024xf32>, vector<16x1024xf32> -> vector<16x1024xf32>
    %c0_12 = arith.constant 0 : index
    %c0_13 = arith.constant 0 : index
    %c2048 = arith.constant 2048 : index
    %29 = vector.load %arg3[%c0_12, %c0_13, %c2048] : memref<1x16x4096xf32, #tpu.memory_space<vmem>>, vector<1x16x1024xf32>
    %30 = vector.shape_cast %29 : vector<1x16x1024xf32> to vector<16x1024xf32>
    %31 = vector.shape_cast %28 : vector<16x1024xf32> to vector<1x16x1024xf32>
    tpu.vector_store %arg3[%c0_12, %c0_13, %c2048], %31 {strides = array<i32>} : memref<1x16x4096xf32, #tpu.memory_space<vmem>>, vector<1x16x1024xf32>,
    %32 = vector.extract_strided_slice %4 {offsets = [0, 3], sizes = [16, 1], strides = [1, 1]} : vector<16x4xi32> to vector<16x1xi32>
    %33 = vector.broadcast %32 : vector<16x1xi32> to vector<16x16xi32>
    %34 = arith.cmpi eq, %33, %0 : vector<16x16xi32>
    %35 = arith.extui %34 : vector<16x16xi1> to vector<16x16xi32>
    %36 = arith.sitofp %35 : vector<16x16xi32> to vector<16x16xf32>
    %cst_14 = arith.constant dense<0.000000e+00> : vector<16x1024xf32>
    %37 = tpu.matmul %36, %2, %cst_14 {dimension_numbers = #tpu.dot_dimension_numbers<[1], [0], [0], [1], [0, 0, 1, 1], [], []>} : vector<16x16xf32>, vector<16x1024xf32>, vector<16x1024xf32> -> vector<16x1024xf32>
    %c0_15 = arith.constant 0 : index
    %c0_16 = arith.constant 0 : index
    %c3072 = arith.constant 3072 : index
    %38 = vector.load %arg3[%c0_15, %c0_16, %c3072] : memref<1x16x4096xf32, #tpu.memory_space<vmem>>, vector<1x16x1024xf32>
    %39 = vector.shape_cast %38 : vector<1x16x1024xf32> to vector<16x1024xf32>
    %40 = vector.shape_cast %37 : vector<16x1024xf32> to vector<1x16x1024xf32>
    tpu.vector_store %arg3[%c0_15, %c0_16, %c3072], %40 {strides = array<i32>} : memref<1x16x4096xf32, #tpu.memory_space<vmem>>, vector<1x16x1024xf32>,
    return
  }
  func.func @transform_0(%arg0: i32) -> (i32, i32, i32) {
    %c0_i32 = arith.constant 0 : i32
    %c0_i32_0 = arith.constant 0 : i32
    %c0_i32_1 = arith.constant 0 : i32
    return %arg0, %c0_i32, %c0_i32_0 : i32, i32, i32
  }
  func.func @transform_1(%arg0: i32) -> (i32, i32, i32) {
    %c0_i32 = arith.constant 0 : i32
    %c0_i32_0 = arith.constant 0 : i32
    %c0_i32_1 = arith.constant 0 : i32
    return %arg0, %c0_i32, %c0_i32_0 : i32, i32, i32
  }
  func.func @transform_2(%arg0: i32) -> (i32, i32, i32) {
    %c0_i32 = arith.constant 0 : i32
    %c0_i32_0 = arith.constant 0 : i32
    %c0_i32_1 = arith.constant 0 : i32
    return %arg0, %c0_i32, %c0_i32_0 : i32, i32, i32
  }
}

</mosaic_0001>

<llo_original>
// kernel: tpu_custom_call.1
$region0: #{tpu_custom_call.1}
  #allocation0 [shape = 'u32[]', space=smem, size = 0x4, offset = 0x4, fixed_abs, tag = 'smem constant byte address 0x4 - core index']
  #allocation1 [shape = 'u32[72,128]{1,0:T(1,128)}', space=vmem, size = 0x9000, scoped, tag = 'internal scratch']
  %s0 = inlined_call_operand.vmem [shape: s32[2,16,4], index: 0, kind: input, shape index: {}]
  %s1 = inlined_call_operand.hbm [shape: f32[2,16,1024], index: 1, kind: input, shape index: {}]
  %s2 = inlined_call_operand.hbm [shape: f32[2,16,4096], index: 2, kind: output, shape index: {}]
  %s3 = sld [smem:[#allocation0]]
  $region45: #{tpu_custom_call.1} parent=0
    _
  %s5 = ssub.s32 1, %s3
  %s6 = scalar_select 0, %s5, %s3
  $region1: #{tpu_custom_call.1} parent=0
    #allocation2 [shape = 'u8[131072]{0}', space=vmem, size = 0x20000, scoped, tag = 'input window, operand 1']
    #allocation3 [shape = 's32[2]{0}', space=sflag, size = 0x8, scoped, tag = 'scoped memory for tpu_custom_call.1']
    #allocation4 [shape = 's32[2]{0}', space=sflag, size = 0x8, scoped, tag = 'scoped memory for tpu_custom_call.1']
    #allocation5 [shape = 'u8[524288]{0}', space=vmem, size = 0x80000, scoped, tag = 'output window, operand 0']
    %7 = vsyncpa [#allocation3], 0
    %s8 = scalar_lea.sflag [#allocation3], 1
    %9 = vsyncpa %s8, 0
    %10 = vsyncpa [#allocation4], 0
    %s11 = scalar_lea.sflag [#allocation4], 1
    %12 = vsyncpa %s11, 0
    loop: start=0, step=1, limit=4
    $region2: #{tpu_custom_call.1} parent=1 // loop_pre_header
      _
    $region3: #{tpu_custom_call.1} parent=1 // loop_header
      %s14 = sphi 0, %s18
      %p15 = scmp.ge.s32.totalorder %s14, 4
      %s24 = sphi 0, %s26
      %s27 = sphi 0, %s24
      %s28 = sphi 0, %s27
      %s44 = sphi 0, %s28
      %s50 = sphi 0, %s52
      %s53 = sphi 0, %s50
      %s54 = sphi 0, %s53
      %s70 = sphi 0, %s54
      %s76 = sphi 0, %s78
      %s79 = sphi 0, %s76
      %s80 = sphi 0, %s79
      %s96 = sphi 0, %s80
    $region4: #{tpu_custom_call.1} parent=1 // loop_header_branch
      %17 = sbr.rel (%p15) target = $region8
    $region5: #{tpu_custom_call.1} parent=1 // loop_body
      %s19 = ssub.s32 %s14, 1
      %s20 = ssub.s32 %s14, 2
      %s21 = sadd.s32 %s14, 1
      %s22 = ssub.s32 %s14, %s21
      %p23 = scmp.eq.s32.totalorder %s22, 0
      %s25 = sadd.s32 %s24, 1
      %s26 = scalar_select %p23, %s24, %s25
      %p29 = pneg %p23
      %p30 = scmp.eq.s32.totalorder %s14, 1
      %p31 = por %p29, %p30
      %p32 = scmp.ne.s32.totalorder %s24, %s27
      %p33 = scmp.eq.s32.totalorder %s14, 0
      %p34 = por %p32, %p33
      %p35 = scmp.ne.s32.totalorder %s24, %s27
      %p36 = scmp.eq.s32.totalorder %s19, 1
      %p37 = por %p35, %p36
      %p38 = scmp.ne.s32.totalorder %s27, %s28
      %p39 = scmp.eq.s32.totalorder %s19, 0
      %p40 = por %p38, %p39
      %p41 = scmp.ne.s32.totalorder %s27, %s28
      %p42 = scmp.eq.s32.totalorder %s20, 1
      %p43 = por %p41, %p42
      %p45 = scmp.ne.s32.totalorder %s28, %s44
      %p46 = scmp.eq.s32.totalorder %s20, 0
      %p47 = por %p45, %p46
      %s48 = ssub.s32 %s14, %s21
      %p49 = scmp.eq.s32.totalorder %s48, 0
      %s51 = sadd.s32 %s50, 1
      %s52 = scalar_select %p49, %s50, %s51
      %p55 = pneg %p49
      %p56 = scmp.eq.s32.totalorder %s14, 1
      %p57 = por %p55, %p56
      %p58 = scmp.ne.s32.totalorder %s50, %s53
      %p59 = scmp.eq.s32.totalorder %s14, 0
      %p60 = por %p58, %p59
      %p61 = scmp.ne.s32.totalorder %s50, %s53
      %p62 = scmp.eq.s32.totalorder %s19, 1
      %p63 = por %p61, %p62
      %p64 = scmp.ne.s32.totalorder %s53, %s54
      %p65 = scmp.eq.s32.totalorder %s19, 0
      %p66 = por %p64, %p65
      %p67 = scmp.ne.s32.totalorder %s53, %s54
      %p68 = scmp.eq.s32.totalorder %s20, 1
      %p69 = por %p67, %p68
      %p71 = scmp.ne.s32.totalorder %s54, %s70
      %p72 = scmp.eq.s32.totalorder %s20, 0
      %p73 = por %p71, %p72
      %s74 = ssub.s32 %s14, %s21
      %p75 = scmp.eq.s32.totalorder %s74, 0
      %s77 = sadd.s32 %s76, 1
      %s78 = scalar_select %p75, %s76, %s77
      %p81 = pneg %p75
      %p82 = scmp.eq.s32.totalorder %s14, 1
      %p83 = por %p81, %p82
      %p84 = scmp.ne.s32.totalorder %s76, %s79
      %p85 = scmp.eq.s32.totalorder %s14, 0
      %p86 = por %p84, %p85
      %p87 = scmp.ne.s32.totalorder %s76, %s79
      %p88 = scmp.eq.s32.totalorder %s19, 1
      %p89 = por %p87, %p88
      %p90 = scmp.ne.s32.totalorder %s79, %s80
      %p91 = scmp.eq.s32.totalorder %s19, 0
      %p92 = por %p90, %p91
      %p93 = scmp.ne.s32.totalorder %s79, %s80
      %p94 = scmp.eq.s32.totalorder %s20, 1
      %p95 = por %p93, %p94
      %p97 = scmp.ne.s32.totalorder %s80, %s96
      %p98 = scmp.eq.s32.totalorder %s20, 0
      %p99 = por %p97, %p98
      %p100 = scmp.le.s32.totalorder 1, %s14
      %p101 = scmp.lt.s32.totalorder %s14, 3
      %p102 = pnand %p100, %p101
      %p103 = pneg %p102
      // Predicated region
      $region9: #{tpu_custom_call.1} parent=5 // pred_check
        _
      $region10: #{tpu_custom_call.1} parent=5 // pred_check_branch
        %105 = sbr.rel (%p102) target = $region12
      $region11: #{tpu_custom_call.1} parent=5 // pred_region
        %s106 = ssub.s32 %s14, 1
      $region12: #{tpu_custom_call.1} parent=5 // pred_fallthru
        _
      %p107 = scmp.lt.s32.totalorder %s14, 2
      // Predicated region
      $region13: #{tpu_custom_call.1} parent=5 // pred_check
        %p108 = pneg %p107
      $region14: #{tpu_custom_call.1} parent=5 // pred_check_branch
        %110 = sbr.rel (%p108) target = $region16
      $region15: #{tpu_custom_call.1} parent=5 // pred_region
        // Predicated region
        $region17: #{tpu_custom_call.1} parent=15 // pred_check
          %p111 = pneg %p34
        $region18: #{tpu_custom_call.1} parent=15 // pred_check_branch
          %113 = sbr.rel (%p111) target = $region20
        $region19: #{tpu_custom_call.1} parent=15 // pred_region
          %p114 = scmp.lt.s32.totalorder %s14, 1
          %s115 = scalar_select %p114, %s14, 1
          %s116 = smul.addr %s115, 2
          %s117 = smul.addr %s116, 8
          %s118 = scalar_lea.vmem %s0, %s117
        $region20: #{tpu_custom_call.1} parent=15 // pred_fallthru
          _
        // Predicated region
        $region21: #{tpu_custom_call.1} parent=15 // pred_check
          %p119 = pneg %p60
        $region22: #{tpu_custom_call.1} parent=15 // pred_check_branch
          %121 = sbr.rel (%p119) target = $region24
        $region23: #{tpu_custom_call.1} parent=15 // pred_region
          %s122 = sand.u32 %s50, 1
          %s123 = scalar_lea.sflag [#allocation3], %s122
          %s124 = sand.u32 %s50, 1
          %s125 = smul.addr %s124, 128
          %s126 = scalar_lea.vmem [#allocation2], %s125
          %128 = vsyncadd %s123, 0
          %s129 = smul.addr %s14, 16
          %s130 = smul.addr %s129, 8
          %s131 = scalar_lea.hbm %s1, %s130
          %s132 = sshll.u32 %s131, 4
          %s133 = int_to_ptr.hbm [resolvable:$true] %s132
          %s134 = sshll.u32 %s126, 4
          %s135 = int_to_ptr.vmem [resolvable:$true] %s134
          %140 = dma.hbm_to_vmem [thread:$0]  %s133, 2048, %s135, %s123, 1024, 1024, 64
        $region24: #{tpu_custom_call.1} parent=15 // pred_fallthru
          _
      $region16: #{tpu_custom_call.1} parent=5 // pred_fallthru
        _
      %p141 = scmp.le.s32.totalorder 1, %s14
      %p142 = scmp.lt.s32.totalorder %s14, 3
      %p143 = pnand %p141, %p142
      %p144 = pneg %p143
      // Predicated region
      $region25: #{tpu_custom_call.1} parent=5 // pred_check
        _
      $region26: #{tpu_custom_call.1} parent=5 // pred_check_branch
        %146 = sbr.rel (%p143) target = $region28
      $region27: #{tpu_custom_call.1} parent=5 // pred_region
        %s147 = ssub.s32 %s14, 1
        %s148 = sand.u32 %s53, 1
        %s149 = scalar_lea.sflag [#allocation3], %s148
        %s150 = sand.u32 %s53, 1
        %s151 = smul.addr %s150, 128
        %s152 = scalar_lea.vmem [#allocation2], %s151
        // Predicated region
        $region29: #{tpu_custom_call.1} parent=27 // pred_check
          %p153 = pneg %p66
        $region30: #{tpu_custom_call.1} parent=27 // pred_check_branch
          %155 = sbr.rel (%p153) target = $region32
        $region31: #{tpu_custom_call.1} parent=27 // pred_region
          %157 = dma.done %s149, 2048
        $region32: #{tpu_custom_call.1} parent=27 // pred_fallthru
          _
        %p158 = scmp.lt.s32.totalorder %s19, 1
        %s159 = scalar_select %p158, %s19, 1
        %s160 = smul.addr %s159, 2
        %s161 = smul.addr %s160, 8
        %s162 = scalar_lea.vmem %s0, %s161
        %p163 = pneg %p40
        %p164 = pneg %p37
        %s165 = sand.u32 %s53, 1
        %s166 = scalar_lea.sflag [#allocation3], %s165
        %s167 = sand.u32 %s53, 1
        %s168 = smul.addr %s167, 128
        %s169 = scalar_lea.vmem [#allocation2], %s168
        %p170 = pneg %p66
        %p171 = pneg %p63
        %p172 = pneg %p92
        %p173 = pneg %p89
        %s174 = sand.u32 %s79, 1
        %s175 = scalar_lea.sflag [#allocation4], %s174
        %s176 = sand.u32 %s79, 1
        %s177 = smul.addr %s176, 512
        %s178 = scalar_lea.vmem [#allocation5], %s177
        %p179 = scmp.lt.s32.totalorder %s19, 1
        %s180 = scalar_select %p179, %s19, 1
        %s181 = smul.addr %s180, 2
        %s182 = smul.addr %s181, 8
        %s183 = scalar_lea.vmem %s0, %s182
        %v184 = vlaneseq
        %v185 = vand.u32 %v184, 127
        %v186 = vld [vmem:[%s152] sm:$0xff]
        %v187 = vld [vmem:[%s152 + $0x8] sm:$0xff]
        %v188 = vld [vmem:[%s152 + $0x10] sm:$0xff]
        %v189 = vld [vmem:[%s152 + $0x18] sm:$0xff]
        %v190 = vld [vmem:[%s152 + $0x20] sm:$0xff]
        %v191 = vld [vmem:[%s152 + $0x28] sm:$0xff]
        %v192 = vld [vmem:[%s152 + $0x30] sm:$0xff]
        %v193 = vld [vmem:[%s152 + $0x38] sm:$0xff]
        %v194 = vld [vmem:[%s152 + $0x40] sm:$0xff]
        %v195 = vld [vmem:[%s152 + $0x48] sm:$0xff]
        %v196 = vld [vmem:[%s152 + $0x50] sm:$0xff]
        %v197 = vld [vmem:[%s152 + $0x58] sm:$0xff]
        %v198 = vld [vmem:[%s152 + $0x60] sm:$0xff]
        %v199 = vld [vmem:[%s152 + $0x68] sm:$0xff]
        %v200 = vld [vmem:[%s152 + $0x70] sm:$0xff]
        %v201 = vld [vmem:[%s152 + $0x78] sm:$0xff]
        %v202 = vld [vmem:[%s183] sm:$0xff]
        %v203 = vld [vmem:[%s183 + $0x8] sm:$0xff]
        %204 = vset.pattern.permute.xlu0 0
        %205 = vperm.xlu0 %204, %v202
        %v206 = vpop.permute.xlu0 %205
        %207 = vset.pattern.permute.xlu0 0
        %208 = vperm.xlu0 %207, %v203
        %v209 = vpop.permute.xlu0 %208
        %vm210 = vcmp.eq.s32.totalorder %v206, %v185
        %vm211 = vcmp.eq.s32.totalorder %v209, %v185
        %v212 = vsel %vm210, 1, 0
        %v213 = vsel %vm211, 1, 0
        %v214 = vcvt.s32.f32 %v212
        %v215 = vcvt.s32.f32 %v213
        %vm216 = vcmask 130048
        %v218 = vsel %vm216, %v214, 0
        %v221 = vsel %vm216, %v215, 0
        %223 = vmatpush.msra.mxu0 0.0
        %224 = vmatpush.msra.mxu0 0.0
        %225 = vmatpush.msra.mxu0 0.0
        %226 = vmatpush.msra.mxu0 0.0
        %227 = vmatpush.msra.mxu0 0.0
        %228 = vmatpush.msra.mxu0 0.0
        %229 = vmatpush.msra.mxu0 0.0
        %230 = vmatpush.msra.mxu0 0.0
        %231 = vmatpush.msra.mxu0 0.0
        %232 = vmatpush.msra.mxu0 0.0
        %233 = vmatpush.msra.mxu0 0.0
        %234 = vmatpush.msra.mxu0 0.0
        %235 = vmatpush.msra.mxu0 0.0
        %236 = vmatpush.msra.mxu0 0.0
        %237 = vmatpush.msra.mxu0 %v194
        %238 = vmatpush.msra.mxu0 %v186
        %239 = vmatmul.f32.gmra.mxu0 %v218
        %v240 = vpop.f32.mrf.mxu0
        %v241 = vadd.f32 0.0, %v240
        %242 = vmatmul.f32.gmra.mxu0 %v221
        %v243 = vpop.f32.mrf.mxu0
        %v244 = vadd.f32 0.0, %v243
        %245 = vdwg.mxu0
        %246 = vmatpush.msra.mxu0 0.0
        %247 = vmatpush.msra.mxu0 0.0
        %248 = vmatpush.msra.mxu0 0.0
        %249 = vmatpush.msra.mxu0 0.0
        %250 = vmatpush.msra.mxu0 0.0
        %251 = vmatpush.msra.mxu0 0.0
        %252 = vmatpush.msra.mxu0 0.0
        %253 = vmatpush.msra.mxu0 0.0
        %254 = vmatpush.msra.mxu0 0.0
        %255 = vmatpush.msra.mxu0 0.0
        %256 = vmatpush.msra.mxu0 0.0
        %257 = vmatpush.msra.mxu0 0.0
        %258 = vmatpush.msra.mxu0 0.0
        %259 = vmatpush.msra.mxu0 0.0
        %260 = vmatpush.msra.mxu0 %v195
        %261 = vmatpush.msra.mxu0 %v187
        %262 = vmatmul.f32.gmra.mxu0 %v218
        %v263 = vpop.f32.mrf.mxu0
        %v264 = vadd.f32 0.0, %v263
        %265 = vmatmul.f32.gmra.mxu0 %v221
        %v266 = vpop.f32.mrf.mxu0
        %v267 = vadd.f32 0.0, %v266
        %268 = vdwg.mxu0
        %269 = vmatpush.msra.mxu0 0.0
        %270 = vmatpush.msra.mxu0 0.0
        %271 = vmatpush.msra.mxu0 0.0
        %272 = vmatpush.msra.mxu0 0.0
        %273 = vmatpush.msra.mxu0 0.0
        %274 = vmatpush.msra.mxu0 0.0
        %275 = vmatpush.msra.mxu0 0.0
        %276 = vmatpush.msra.mxu0 0.0
        %277 = vmatpush.msra.mxu0 0.0
        %278 = vmatpush.msra.mxu0 0.0
        %279 = vmatpush.msra.mxu0 0.0
        %280 = vmatpush.msra.mxu0 0.0
        %281 = vmatpush.msra.mxu0 0.0
        %282 = vmatpush.msra.mxu0 0.0
        %283 = vmatpush.msra.mxu0 %v196
        %284 = vmatpush.msra.mxu0 %v188
        %285 = vmatmul.f32.gmra.mxu0 %v218
        %v286 = vpop.f32.mrf.mxu0
        %v287 = vadd.f32 0.0, %v286
        %288 = vmatmul.f32.gmra.mxu0 %v221
        %v289 = vpop.f32.mrf.mxu0
        %v290 = vadd.f32 0.0, %v289
        %291 = vdwg.mxu0
        %292 = vmatpush.msra.mxu0 0.0
        %293 = vmatpush.msra.mxu0 0.0
        %294 = vmatpush.msra.mxu0 0.0
        %295 = vmatpush.msra.mxu0 0.0
        %296 = vmatpush.msra.mxu0 0.0
        %297 = vmatpush.msra.mxu0 0.0
        %298 = vmatpush.msra.mxu0 0.0
        %299 = vmatpush.msra.mxu0 0.0
        %300 = vmatpush.msra.mxu0 0.0
        %301 = vmatpush.msra.mxu0 0.0
        %302 = vmatpush.msra.mxu0 0.0
        %303 = vmatpush.msra.mxu0 0.0
        %304 = vmatpush.msra.mxu0 0.0
        %305 = vmatpush.msra.mxu0 0.0
        %306 = vmatpush.msra.mxu0 %v197
        %307 = vmatpush.msra.mxu0 %v189
        %308 = vmatmul.f32.gmra.mxu0 %v218
        %v309 = vpop.f32.mrf.mxu0
        %v310 = vadd.f32 0.0, %v309
        %311 = vmatmul.f32.gmra.mxu0 %v221
        %v312 = vpop.f32.mrf.mxu0
        %v313 = vadd.f32 0.0, %v312
        %314 = vdwg.mxu0
        %315 = vmatpush.msra.mxu0 0.0
        %316 = vmatpush.msra.mxu0 0.0
        %317 = vmatpush.msra.mxu0 0.0
        %318 = vmatpush.msra.mxu0 0.0
        %319 = vmatpush.msra.mxu0 0.0
        %320 = vmatpush.msra.mxu0 0.0
        %321 = vmatpush.msra.mxu0 0.0
        %322 = vmatpush.msra.mxu0 0.0
        %323 = vmatpush.msra.mxu0 0.0
        %324 = vmatpush.msra.mxu0 0.0
        %325 = vmatpush.msra.mxu0 0.0
        %326 = vmatpush.msra.mxu0 0.0
        %327 = vmatpush.msra.mxu0 0.0
        %328 = vmatpush.msra.mxu0 0.0
        %329 = vmatpush.msra.mxu0 %v198
        %330 = vmatpush.msra.mxu0 %v190
        %331 = vmatmul.f32.gmra.mxu0 %v218
        %v332 = vpop.f32.mrf.mxu0
        %v333 = vadd.f32 0.0, %v332
        %334 = vmatmul.f32.gmra.mxu0 %v221
        %v335 = vpop.f32.mrf.mxu0
        %v336 = vadd.f32 0.0, %v335
        %337 = vdwg.mxu0
        %338 = vmatpush.msra.mxu0 0.0
        %339 = vmatpush.msra.mxu0 0.0
        %340 = vmatpush.msra.mxu0 0.0
        %341 = vmatpush.msra.mxu0 0.0
        %342 = vmatpush.msra.mxu0 0.0
        %343 = vmatpush.msra.mxu0 0.0
        %344 = vmatpush.msra.mxu0 0.0
        %345 = vmatpush.msra.mxu0 0.0
        %346 = vmatpush.msra.mxu0 0.0
        %347 = vmatpush.msra.mxu0 0.0
        %348 = vmatpush.msra.mxu0 0.0
        %349 = vmatpush.msra.mxu0 0.0
        %350 = vmatpush.msra.mxu0 0.0
        %351 = vmatpush.msra.mxu0 0.0
        %352 = vmatpush.msra.mxu0 %v199
        %353 = vmatpush.msra.mxu0 %v191
        %354 = vmatmul.f32.gmra.mxu0 %v218
        %v355 = vpop.f32.mrf.mxu0
        %v356 = vadd.f32 0.0, %v355
        %357 = vmatmul.f32.gmra.mxu0 %v221
        %v358 = vpop.f32.mrf.mxu0
        %v359 = vadd.f32 0.0, %v358
        %360 = vdwg.mxu0
        %361 = vmatpush.msra.mxu0 0.0
        %362 = vmatpush.msra.mxu0 0.0
        %363 = vmatpush.msra.mxu0 0.0
        %364 = vmatpush.msra.mxu0 0.0
        %365 = vmatpush.msra.mxu0 0.0
        %366 = vmatpush.msra.mxu0 0.0
        %367 = vmatpush.msra.mxu0 0.0
        %368 = vmatpush.msra.mxu0 0.0
        %369 = vmatpush.msra.mxu0 0.0
        %370 = vmatpush.msra.mxu0 0.0
        %371 = vmatpush.msra.mxu0 0.0
        %372 = vmatpush.msra.mxu0 0.0
        %373 = vmatpush.msra.mxu0 0.0
        %374 = vmatpush.msra.mxu0 0.0
        %375 = vmatpush.msra.mxu0 %v200
        %376 = vmatpush.msra.mxu0 %v192
        %377 = vmatmul.f32.gmra.mxu0 %v218
        %v378 = vpop.f32.mrf.mxu0
        %v379 = vadd.f32 0.0, %v378
        %380 = vmatmul.f32.gmra.mxu0 %v221
        %v381 = vpop.f32.mrf.mxu0
        %v382 = vadd.f32 0.0, %v381
        %383 = vdwg.mxu0
        %384 = vmatpush.msra.mxu0 0.0
        %385 = vmatpush.msra.mxu0 0.0
        %386 = vmatpush.msra.mxu0 0.0
        %387 = vmatpush.msra.mxu0 0.0
        %388 = vmatpush.msra.mxu0 0.0
        %389 = vmatpush.msra.mxu0 0.0
        %390 = vmatpush.msra.mxu0 0.0
        %391 = vmatpush.msra.mxu0 0.0
        %392 = vmatpush.msra.mxu0 0.0
        %393 = vmatpush.msra.mxu0 0.0
        %394 = vmatpush.msra.mxu0 0.0
        %395 = vmatpush.msra.mxu0 0.0
        %396 = vmatpush.msra.mxu0 0.0
        %397 = vmatpush.msra.mxu0 0.0
        %398 = vmatpush.msra.mxu0 %v201
        %399 = vmatpush.msra.mxu0 %v193
        %400 = vmatmul.f32.gmra.mxu0 %v218
        %v401 = vpop.f32.mrf.mxu0
        %v402 = vadd.f32 0.0, %v401
        %403 = vmatmul.f32.gmra.mxu0 %v221
        %v404 = vpop.f32.mrf.mxu0
        %v405 = vadd.f32 0.0, %v404
        %406 = vdwg.mxu0
        %407 = vst [vmem:[%s178] sm:$0xff] %v241
        %408 = vst [vmem:[%s178 + $0x8] sm:$0xff] %v264
        %409 = vst [vmem:[%s178 + $0x10] sm:$0xff] %v287
        %410 = vst [vmem:[%s178 + $0x18] sm:$0xff] %v310
        %411 = vst [vmem:[%s178 + $0x20] sm:$0xff] %v333
        %412 = vst [vmem:[%s178 + $0x28] sm:$0xff] %v356
        %413 = vst [vmem:[%s178 + $0x30] sm:$0xff] %v379
        %414 = vst [vmem:[%s178 + $0x38] sm:$0xff] %v402
        %415 = vst [vmem:[%s178 + $0x100] sm:$0xff] %v244
        %416 = vst [vmem:[%s178 + $0x108] sm:$0xff] %v267
        %417 = vst [vmem:[%s178 + $0x110] sm:$0xff] %v290
        %418 = vst [vmem:[%s178 + $0x118] sm:$0xff] %v313
        %419 = vst [vmem:[%s178 + $0x120] sm:$0xff] %v336
        %420 = vst [vmem:[%s178 + $0x128] sm:$0xff] %v359
        %421 = vst [vmem:[%s178 + $0x130] sm:$0xff] %v382
        %422 = vst [vmem:[%s178 + $0x138] sm:$0xff] %v405
        %423 = vset.pattern.permute.xlu0 1
        %424 = vperm.xlu0 %423, %v202
        %v425 = vpop.permute.xlu0 %424
        %426 = vset.pattern.permute.xlu0 1
        %427 = vperm.xlu0 %426, %v203
        %v428 = vpop.permute.xlu0 %427
        %vm429 = vcmp.eq.s32.totalorder %v425, %v185
        %vm430 = vcmp.eq.s32.totalorder %v428, %v185
        %v431 = vsel %vm429, 1, 0
        %v432 = vsel %vm430, 1, 0
        %v433 = vcvt.s32.f32 %v431
        %v434 = vcvt.s32.f32 %v432
        %v436 = vsel %vm216, %v433, 0
        %v439 = vsel %vm216, %v434, 0
        %441 = vmatpush.msra.mxu0 0.0
        %442 = vmatpush.msra.mxu0 0.0
        %443 = vmatpush.msra.mxu0 0.0
        %444 = vmatpush.msra.mxu0 0.0
        %445 = vmatpush.msra.mxu0 0.0
        %446 = vmatpush.msra.mxu0 0.0
        %447 = vmatpush.msra.mxu0 0.0
        %448 = vmatpush.msra.mxu0 0.0
        %449 = vmatpush.msra.mxu0 0.0
        %450 = vmatpush.msra.mxu0 0.0
        %451 = vmatpush.msra.mxu0 0.0
        %452 = vmatpush.msra.mxu0 0.0
        %453 = vmatpush.msra.mxu0 0.0
        %454 = vmatpush.msra.mxu0 0.0
        %455 = vmatpush.msra.mxu0 %v194
        %456 = vmatpush.msra.mxu0 %v186
        %457 = vmatmul.f32.gmra.mxu0 %v436
        %v458 = vpop.f32.mrf.mxu0
        %v459 = vadd.f32 0.0, %v458
        %460 = vmatmul.f32.gmra.mxu0 %v439
        %v461 = vpop.f32.mrf.mxu0
        %v462 = vadd.f32 0.0, %v461
        %463 = vdwg.mxu0
        %464 = vmatpush.msra.mxu0 0.0
        %465 = vmatpush.msra.mxu0 0.0
        %466 = vmatpush.msra.mxu0 0.0
        %467 = vmatpush.msra.mxu0 0.0
        %468 = vmatpush.msra.mxu0 0.0
        %469 = vmatpush.msra.mxu0 0.0
        %470 = vmatpush.msra.mxu0 0.0
        %471 = vmatpush.msra.mxu0 0.0
        %472 = vmatpush.msra.mxu0 0.0
        %473 = vmatpush.msra.mxu0 0.0
        %474 = vmatpush.msra.mxu0 0.0
        %475 = vmatpush.msra.mxu0 0.0
        %476 = vmatpush.msra.mxu0 0.0
        %477 = vmatpush.msra.mxu0 0.0
        %478 = vmatpush.msra.mxu0 %v195
        %479 = vmatpush.msra.mxu0 %v187
        %480 = vmatmul.f32.gmra.mxu0 %v436
        %v481 = vpop.f32.mrf.mxu0
        %v482 = vadd.f32 0.0, %v481
        %483 = vmatmul.f32.gmra.mxu0 %v439
        %v484 = vpop.f32.mrf.mxu0
        %v485 = vadd.f32 0.0, %v484
        %486 = vdwg.mxu0
        %487 = vmatpush.msra.mxu0 0.0
        %488 = vmatpush.msra.mxu0 0.0
        %489 = vmatpush.msra.mxu0 0.0
        %490 = vmatpush.msra.mxu0 0.0
        %491 = vmatpush.msra.mxu0 0.0
        %492 = vmatpush.msra.mxu0 0.0
        %493 = vmatpush.msra.mxu0 0.0
        %494 = vmatpush.msra.mxu0 0.0
        %495 = vmatpush.msra.mxu0 0.0
        %496 = vmatpush.msra.mxu0 0.0
        %497 = vmatpush.msra.mxu0 0.0
        %498 = vmatpush.msra.mxu0 0.0
        %499 = vmatpush.msra.mxu0 0.0
        %500 = vmatpush.msra.mxu0 0.0
        %501 = vmatpush.msra.mxu0 %v196
        %502 = vmatpush.msra.mxu0 %v188
        %503 = vmatmul.f32.gmra.mxu0 %v436
        %v504 = vpop.f32.mrf.mxu0
        %v505 = vadd.f32 0.0, %v504
        %506 = vmatmul.f32.gmra.mxu0 %v439
        %v507 = vpop.f32.mrf.mxu0
        %v508 = vadd.f32 0.0, %v507
        %509 = vdwg.mxu0
        %510 = vmatpush.msra.mxu0 0.0
        %511 = vmatpush.msra.mxu0 0.0
        %512 = vmatpush.msra.mxu0 0.0
        %513 = vmatpush.msra.mxu0 0.0
        %514 = vmatpush.msra.mxu0 0.0
        %515 = vmatpush.msra.mxu0 0.0
        %516 = vmatpush.msra.mxu0 0.0
        %517 = vmatpush.msra.mxu0 0.0
        %518 = vmatpush.msra.mxu0 0.0
        %519 = vmatpush.msra.mxu0 0.0
        %520 = vmatpush.msra.mxu0 0.0
        %521 = vmatpush.msra.mxu0 0.0
        %522 = vmatpush.msra.mxu0 0.0
        %523 = vmatpush.msra.mxu0 0.0
        %524 = vmatpush.msra.mxu0 %v197
        %525 = vmatpush.msra.mxu0 %v189
        %526 = vmatmul.f32.gmra.mxu0 %v436
        %v527 = vpop.f32.mrf.mxu0
        %v528 = vadd.f32 0.0, %v527
        %529 = vmatmul.f32.gmra.mxu0 %v439
        %v530 = vpop.f32.mrf.mxu0
        %v531 = vadd.f32 0.0, %v530
        %532 = vdwg.mxu0
        %533 = vmatpush.msra.mxu0 0.0
        %534 = vmatpush.msra.mxu0 0.0
        %535 = vmatpush.msra.mxu0 0.0
        %536 = vmatpush.msra.mxu0 0.0
        %537 = vmatpush.msra.mxu0 0.0
        %538 = vmatpush.msra.mxu0 0.0
        %539 = vmatpush.msra.mxu0 0.0
        %540 = vmatpush.msra.mxu0 0.0
        %541 = vmatpush.msra.mxu0 0.0
        %542 = vmatpush.msra.mxu0 0.0
        %543 = vmatpush.msra.mxu0 0.0
        %544 = vmatpush.msra.mxu0 0.0
        %545 = vmatpush.msra.mxu0 0.0
        %546 = vmatpush.msra.mxu0 0.0
        %547 = vmatpush.msra.mxu0 %v198
        %548 = vmatpush.msra.mxu0 %v190
        %549 = vmatmul.f32.gmra.mxu0 %v436
        %v550 = vpop.f32.mrf.mxu0
        %v551 = vadd.f32 0.0, %v550
        %552 = vmatmul.f32.gmra.mxu0 %v439
        %v553 = vpop.f32.mrf.mxu0
        %v554 = vadd.f32 0.0, %v553
        %555 = vdwg.mxu0
        %556 = vmatpush.msra.mxu0 0.0
        %557 = vmatpush.msra.mxu0 0.0
        %558 = vmatpush.msra.mxu0 0.0
        %559 = vmatpush.msra.mxu0 0.0
        %560 = vmatpush.msra.mxu0 0.0
        %561 = vmatpush.msra.mxu0 0.0
        %562 = vmatpush.msra.mxu0 0.0
        %563 = vmatpush.msra.mxu0 0.0
        %564 = vmatpush.msra.mxu0 0.0
        %565 = vmatpush.msra.mxu0 0.0
        %566 = vmatpush.msra.mxu0 0.0
        %567 = vmatpush.msra.mxu0 0.0
        %568 = vmatpush.msra.mxu0 0.0
        %569 = vmatpush.msra.mxu0 0.0
        %570 = vmatpush.msra.mxu0 %v199
        %571 = vmatpush.msra.mxu0 %v191
        %572 = vmatmul.f32.gmra.mxu0 %v436
        %v573 = vpop.f32.mrf.mxu0
        %v574 = vadd.f32 0.0, %v573
        %575 = vmatmul.f32.gmra.mxu0 %v439
        %v576 = vpop.f32.mrf.mxu0
        %v577 = vadd.f32 0.0, %v576
        %578 = vdwg.mxu0
        %579 = vmatpush.msra.mxu0 0.0
        %580 = vmatpush.msra.mxu0 0.0
        %581 = vmatpush.msra.mxu0 0.0
        %582 = vmatpush.msra.mxu0 0.0
        %583 = vmatpush.msra.mxu0 0.0
        %584 = vmatpush.msra.mxu0 0.0
        %585 = vmatpush.msra.mxu0 0.0
        %586 = vmatpush.msra.mxu0 0.0
        %587 = vmatpush.msra.mxu0 0.0
        %588 = vmatpush.msra.mxu0 0.0
        %589 = vmatpush.msra.mxu0 0.0
        %590 = vmatpush.msra.mxu0 0.0
        %591 = vmatpush.msra.mxu0 0.0
        %592 = vmatpush.msra.mxu0 0.0
        %593 = vmatpush.msra.mxu0 %v200
        %594 = vmatpush.msra.mxu0 %v192
        %595 = vmatmul.f32.gmra.mxu0 %v436
        %v596 = vpop.f32.mrf.mxu0
        %v597 = vadd.f32 0.0, %v596
        %598 = vmatmul.f32.gmra.mxu0 %v439
        %v599 = vpop.f32.mrf.mxu0
        %v600 = vadd.f32 0.0, %v599
        %601 = vdwg.mxu0
        %602 = vmatpush.msra.mxu0 0.0
        %603 = vmatpush.msra.mxu0 0.0
        %604 = vmatpush.msra.mxu0 0.0
        %605 = vmatpush.msra.mxu0 0.0
        %606 = vmatpush.msra.mxu0 0.0
        %607 = vmatpush.msra.mxu0 0.0
        %608 = vmatpush.msra.mxu0 0.0
        %609 = vmatpush.msra.mxu0 0.0
        %610 = vmatpush.msra.mxu0 0.0
        %611 = vmatpush.msra.mxu0 0.0
        %612 = vmatpush.msra.mxu0 0.0
        %613 = vmatpush.msra.mxu0 0.0
        %614 = vmatpush.msra.mxu0 0.0
        %615 = vmatpush.msra.mxu0 0.0
        %616 = vmatpush.msra.mxu0 %v201
        %617 = vmatpush.msra.mxu0 %v193
        %618 = vmatmul.f32.gmra.mxu0 %v436
        %v619 = vpop.f32.mrf.mxu0
        %v620 = vadd.f32 0.0, %v619
        %621 = vmatmul.f32.gmra.mxu0 %v439
        %v622 = vpop.f32.mrf.mxu0
        %v623 = vadd.f32 0.0, %v622
        %624 = vdwg.mxu0
        %625 = vst [vmem:[%s178 + $0x40] sm:$0xff] %v459
        %626 = vst [vmem:[%s178 + $0x48] sm:$0xff] %v482
        %627 = vst [vmem:[%s178 + $0x50] sm:$0xff] %v505
        %628 = vst [vmem:[%s178 + $0x58] sm:$0xff] %v528
        %629 = vst [vmem:[%s178 + $0x60] sm:$0xff] %v551
        %630 = vst [vmem:[%s178 + $0x68] sm:$0xff] %v574
        %631 = vst [vmem:[%s178 + $0x70] sm:$0xff] %v597
        %632 = vst [vmem:[%s178 + $0x78] sm:$0xff] %v620
        %633 = vst [vmem:[%s178 + $0x140] sm:$0xff] %v462
        %634 = vst [vmem:[%s178 + $0x148] sm:$0xff] %v485
        %635 = vst [vmem:[%s178 + $0x150] sm:$0xff] %v508
        %636 = vst [vmem:[%s178 + $0x158] sm:$0xff] %v531
        %637 = vst [vmem:[%s178 + $0x160] sm:$0xff] %v554
        %638 = vst [vmem:[%s178 + $0x168] sm:$0xff] %v577
        %639 = vst [vmem:[%s178 + $0x170] sm:$0xff] %v600
        %640 = vst [vmem:[%s178 + $0x178] sm:$0xff] %v623
        %641 = vset.pattern.permute.xlu0 2
        %642 = vperm.xlu0 %641, %v202
        %v643 = vpop.permute.xlu0 %642
        %644 = vset.pattern.permute.xlu0 2
        %645 = vperm.xlu0 %644, %v203
        %v646 = vpop.permute.xlu0 %645
        %vm647 = vcmp.eq.s32.totalorder %v643, %v185
        %vm648 = vcmp.eq.s32.totalorder %v646, %v185
        %v649 = vsel %vm647, 1, 0
        %v650 = vsel %vm648, 1, 0
        %v651 = vcvt.s32.f32 %v649
        %v652 = vcvt.s32.f32 %v650
        %v654 = vsel %vm216, %v651, 0
        %v657 = vsel %vm216, %v652, 0
        %659 = vmatpush.msra.mxu0 0.0
        %660 = vmatpush.msra.mxu0 0.0
        %661 = vmatpush.msra.mxu0 0.0
        %662 = vmatpush.msra.mxu0 0.0
        %663 = vmatpush.msra.mxu0 0.0
        %664 = vmatpush.msra.mxu0 0.0
        %665 = vmatpush.msra.mxu0 0.0
        %666 = vmatpush.msra.mxu0 0.0
        %667 = vmatpush.msra.mxu0 0.0
        %668 = vmatpush.msra.mxu0 0.0
        %669 = vmatpush.msra.mxu0 0.0
        %670 = vmatpush.msra.mxu0 0.0
        %671 = vmatpush.msra.mxu0 0.0
        %672 = vmatpush.msra.mxu0 0.0
        %673 = vmatpush.msra.mxu0 %v194
        %674 = vmatpush.msra.mxu0 %v186
        %675 = vmatmul.f32.gmra.mxu0 %v654
        %v676 = vpop.f32.mrf.mxu0
        %v677 = vadd.f32 0.0, %v676
        %678 = vmatmul.f32.gmra.mxu0 %v657
        %v679 = vpop.f32.mrf.mxu0
        %v680 = vadd.f32 0.0, %v679
        %681 = vdwg.mxu0
        %682 = vmatpush.msra.mxu0 0.0
        %683 = vmatpush.msra.mxu0 0.0
        %684 = vmatpush.msra.mxu0 0.0
        %685 = vmatpush.msra.mxu0 0.0
        %686 = vmatpush.msra.mxu0 0.0
        %687 = vmatpush.msra.mxu0 0.0
        %688 = vmatpush.msra.mxu0 0.0
        %689 = vmatpush.msra.mxu0 0.0
        %690 = vmatpush.msra.mxu0 0.0
        %691 = vmatpush.msra.mxu0 0.0
        %692 = vmatpush.msra.mxu0 0.0
        %693 = vmatpush.msra.mxu0 0.0
        %694 = vmatpush.msra.mxu0 0.0
        %695 = vmatpush.msra.mxu0 0.0
        %696 = vmatpush.msra.mxu0 %v195
        %697 = vmatpush.msra.mxu0 %v187
        %698 = vmatmul.f32.gmra.mxu0 %v654
        %v699 = vpop.f32.mrf.mxu0
        %v700 = vadd.f32 0.0, %v699
        %701 = vmatmul.f32.gmra.mxu0 %v657
        %v702 = vpop.f32.mrf.mxu0
        %v703 = vadd.f32 0.0, %v702
        %704 = vdwg.mxu0
        %705 = vmatpush.msra.mxu0 0.0
        %706 = vmatpush.msra.mxu0 0.0
        %707 = vmatpush.msra.mxu0 0.0
        %708 = vmatpush.msra.mxu0 0.0
        %709 = vmatpush.msra.mxu0 0.0
        %710 = vmatpush.msra.mxu0 0.0
        %711 = vmatpush.msra.mxu0 0.0
        %712 = vmatpush.msra.mxu0 0.0
        %713 = vmatpush.msra.mxu0 0.0
        %714 = vmatpush.msra.mxu0 0.0
        %715 = vmatpush.msra.mxu0 0.0
        %716 = vmatpush.msra.mxu0 0.0
        %717 = vmatpush.msra.mxu0 0.0
        %718 = vmatpush.msra.mxu0 0.0
        %719 = vmatpush.msra.mxu0 %v196
        %720 = vmatpush.msra.mxu0 %v188
        %721 = vmatmul.f32.gmra.mxu0 %v654
        %v722 = vpop.f32.mrf.mxu0
        %v723 = vadd.f32 0.0, %v722
        %724 = vmatmul.f32.gmra.mxu0 %v657
        %v725 = vpop.f32.mrf.mxu0
        %v726 = vadd.f32 0.0, %v725
        %727 = vdwg.mxu0
        %728 = vmatpush.msra.mxu0 0.0
        %729 = vmatpush.msra.mxu0 0.0
        %730 = vmatpush.msra.mxu0 0.0
        %731 = vmatpush.msra.mxu0 0.0
        %732 = vmatpush.msra.mxu0 0.0
        %733 = vmatpush.msra.mxu0 0.0
        %734 = vmatpush.msra.mxu0 0.0
        %735 = vmatpush.msra.mxu0 0.0
        %736 = vmatpush.msra.mxu0 0.0
        %737 = vmatpush.msra.mxu0 0.0
        %738 = vmatpush.msra.mxu0 0.0
        %739 = vmatpush.msra.mxu0 0.0
        %740 = vmatpush.msra.mxu0 0.0
        %741 = vmatpush.msra.mxu0 0.0
        %742 = vmatpush.msra.mxu0 %v197
        %743 = vmatpush.msra.mxu0 %v189
        %744 = vmatmul.f32.gmra.mxu0 %v654
        %v745 = vpop.f32.mrf.mxu0
        %v746 = vadd.f32 0.0, %v745
        %747 = vmatmul.f32.gmra.mxu0 %v657
        %v748 = vpop.f32.mrf.mxu0
        %v749 = vadd.f32 0.0, %v748
        %750 = vdwg.mxu0
        %751 = vmatpush.msra.mxu0 0.0
        %752 = vmatpush.msra.mxu0 0.0
        %753 = vmatpush.msra.mxu0 0.0
        %754 = vmatpush.msra.mxu0 0.0
        %755 = vmatpush.msra.mxu0 0.0
        %756 = vmatpush.msra.mxu0 0.0
        %757 = vmatpush.msra.mxu0 0.0
        %758 = vmatpush.msra.mxu0 0.0
        %759 = vmatpush.msra.mxu0 0.0
        %760 = vmatpush.msra.mxu0 0.0
        %761 = vmatpush.msra.mxu0 0.0
        %762 = vmatpush.msra.mxu0 0.0
        %763 = vmatpush.msra.mxu0 0.0
        %764 = vmatpush.msra.mxu0 0.0
        %765 = vmatpush.msra.mxu0 %v198
        %766 = vmatpush.msra.mxu0 %v190
        %767 = vmatmul.f32.gmra.mxu0 %v654
        %v768 = vpop.f32.mrf.mxu0
        %v769 = vadd.f32 0.0, %v768
        %770 = vmatmul.f32.gmra.mxu0 %v657
        %v771 = vpop.f32.mrf.mxu0
        %v772 = vadd.f32 0.0, %v771
        %773 = vdwg.mxu0
        %774 = vmatpush.msra.mxu0 0.0
        %775 = vmatpush.msra.mxu0 0.0
        %776 = vmatpush.msra.mxu0 0.0
        %777 = vmatpush.msra.mxu0 0.0
        %778 = vmatpush.msra.mxu0 0.0
        %779 = vmatpush.msra.mxu0 0.0
        %780 = vmatpush.msra.mxu0 0.0
        %781 = vmatpush.msra.mxu0 0.0
        %782 = vmatpush.msra.mxu0 0.0
        %783 = vmatpush.msra.mxu0 0.0
        %784 = vmatpush.msra.mxu0 0.0
        %785 = vmatpush.msra.mxu0 0.0
        %786 = vmatpush.msra.mxu0 0.0
        %787 = vmatpush.msra.mxu0 0.0
        %788 = vmatpush.msra.mxu0 %v199
        %789 = vmatpush.msra.mxu0 %v191
        %790 = vmatmul.f32.gmra.mxu0 %v654
        %v791 = vpop.f32.mrf.mxu0
        %v792 = vadd.f32 0.0, %v791
        %793 = vmatmul.f32.gmra.mxu0 %v657
        %v794 = vpop.f32.mrf.mxu0
        %v795 = vadd.f32 0.0, %v794
        %796 = vdwg.mxu0
        %797 = vmatpush.msra.mxu0 0.0
        %798 = vmatpush.msra.mxu0 0.0
        %799 = vmatpush.msra.mxu0 0.0
        %800 = vmatpush.msra.mxu0 0.0
        %801 = vmatpush.msra.mxu0 0.0
        %802 = vmatpush.msra.mxu0 0.0
        %803 = vmatpush.msra.mxu0 0.0
        %804 = vmatpush.msra.mxu0 0.0
        %805 = vmatpush.msra.mxu0 0.0
        %806 = vmatpush.msra.mxu0 0.0
        %807 = vmatpush.msra.mxu0 0.0
        %808 = vmatpush.msra.mxu0 0.0
        %809 = vmatpush.msra.mxu0 0.0
        %810 = vmatpush.msra.mxu0 0.0
        %811 = vmatpush.msra.mxu0 %v200
        %812 = vmatpush.msra.mxu0 %v192
        %813 = vmatmul.f32.gmra.mxu0 %v654
        %v814 = vpop.f32.mrf.mxu0
        %v815 = vadd.f32 0.0, %v814
        %816 = vmatmul.f32.gmra.mxu0 %v657
        %v817 = vpop.f32.mrf.mxu0
        %v818 = vadd.f32 0.0, %v817
        %819 = vdwg.mxu0
        %820 = vmatpush.msra.mxu0 0.0
        %821 = vmatpush.msra.mxu0 0.0
        %822 = vmatpush.msra.mxu0 0.0
        %823 = vmatpush.msra.mxu0 0.0
        %824 = vmatpush.msra.mxu0 0.0
        %825 = vmatpush.msra.mxu0 0.0
        %826 = vmatpush.msra.mxu0 0.0
        %827 = vmatpush.msra.mxu0 0.0
        %828 = vmatpush.msra.mxu0 0.0
        %829 = vmatpush.msra.mxu0 0.0
        %830 = vmatpush.msra.mxu0 0.0
        %831 = vmatpush.msra.mxu0 0.0
        %832 = vmatpush.msra.mxu0 0.0
        %833 = vmatpush.msra.mxu0 0.0
        %834 = vmatpush.msra.mxu0 %v201
        %835 = vmatpush.msra.mxu0 %v193
        %836 = vmatmul.f32.gmra.mxu0 %v654
        %v837 = vpop.f32.mrf.mxu0
        %v838 = vadd.f32 0.0, %v837
        %839 = vmatmul.f32.gmra.mxu0 %v657
        %v840 = vpop.f32.mrf.mxu0
        %v841 = vadd.f32 0.0, %v840
        %842 = vdwg.mxu0
        %843 = vst [vmem:[%s178 + $0x80] sm:$0xff] %v677
        %844 = vst [vmem:[%s178 + $0x88] sm:$0xff] %v700
        %845 = vst [vmem:[%s178 + $0x90] sm:$0xff] %v723
        %846 = vst [vmem:[%s178 + $0x98] sm:$0xff] %v746
        %847 = vst [vmem:[%s178 + $0xa0] sm:$0xff] %v769
        %848 = vst [vmem:[%s178 + $0xa8] sm:$0xff] %v792
        %849 = vst [vmem:[%s178 + $0xb0] sm:$0xff] %v815
        %850 = vst [vmem:[%s178 + $0xb8] sm:$0xff] %v838
        %851 = vst [vmem:[%s178 + $0x180] sm:$0xff] %v680
        %852 = vst [vmem:[%s178 + $0x188] sm:$0xff] %v703
        %853 = vst [vmem:[%s178 + $0x190] sm:$0xff] %v726
        %854 = vst [vmem:[%s178 + $0x198] sm:$0xff] %v749
        %855 = vst [vmem:[%s178 + $0x1a0] sm:$0xff] %v772
        %856 = vst [vmem:[%s178 + $0x1a8] sm:$0xff] %v795
        %857 = vst [vmem:[%s178 + $0x1b0] sm:$0xff] %v818
        %858 = vst [vmem:[%s178 + $0x1b8] sm:$0xff] %v841
        %859 = vset.pattern.permute.xlu0 3
        %860 = vperm.xlu0 %859, %v202
        %v861 = vpop.permute.xlu0 %860
        %862 = vset.pattern.permute.xlu0 3
        %863 = vperm.xlu0 %862, %v203
        %v864 = vpop.permute.xlu0 %863
        %vm865 = vcmp.eq.s32.totalorder %v861, %v185
        %vm866 = vcmp.eq.s32.totalorder %v864, %v185
        %v867 = vsel %vm865, 1, 0
        %v868 = vsel %vm866, 1, 0
        %v869 = vcvt.s32.f32 %v867
        %v870 = vcvt.s32.f32 %v868
        %v872 = vsel %vm216, %v869, 0
        %v875 = vsel %vm216, %v870, 0
        %877 = vmatpush.msra.mxu0 0.0
        %878 = vmatpush.msra.mxu0 0.0
        %879 = vmatpush.msra.mxu0 0.0
        %880 = vmatpush.msra.mxu0 0.0
        %881 = vmatpush.msra.mxu0 0.0
        %882 = vmatpush.msra.mxu0 0.0
        %883 = vmatpush.msra.mxu0 0.0
        %884 = vmatpush.msra.mxu0 0.0
        %885 = vmatpush.msra.mxu0 0.0
        %886 = vmatpush.msra.mxu0 0.0
        %887 = vmatpush.msra.mxu0 0.0
        %888 = vmatpush.msra.mxu0 0.0
        %889 = vmatpush.msra.mxu0 0.0
        %890 = vmatpush.msra.mxu0 0.0
        %891 = vmatpush.msra.mxu0 %v194
        %892 = vmatpush.msra.mxu0 %v186
        %893 = vmatmul.f32.gmra.mxu0 %v872
        %v894 = vpop.f32.mrf.mxu0
        %v895 = vadd.f32 0.0, %v894
        %896 = vmatmul.f32.gmra.mxu0 %v875
        %v897 = vpop.f32.mrf.mxu0
        %v898 = vadd.f32 0.0, %v897
        %899 = vdwg.mxu0
        %900 = vmatpush.msra.mxu0 0.0
        %901 = vmatpush.msra.mxu0 0.0
        %902 = vmatpush.msra.mxu0 0.0
        %903 = vmatpush.msra.mxu0 0.0
        %904 = vmatpush.msra.mxu0 0.0
        %905 = vmatpush.msra.mxu0 0.0
        %906 = vmatpush.msra.mxu0 0.0
        %907 = vmatpush.msra.mxu0 0.0
        %908 = vmatpush.msra.mxu0 0.0
        %909 = vmatpush.msra.mxu0 0.0
        %910 = vmatpush.msra.mxu0 0.0
        %911 = vmatpush.msra.mxu0 0.0
        %912 = vmatpush.msra.mxu0 0.0
        %913 = vmatpush.msra.mxu0 0.0
        %914 = vmatpush.msra.mxu0 %v195
        %915 = vmatpush.msra.mxu0 %v187
        %916 = vmatmul.f32.gmra.mxu0 %v872
        %v917 = vpop.f32.mrf.mxu0
        %v918 = vadd.f32 0.0, %v917
        %919 = vmatmul.f32.gmra.mxu0 %v875
        %v920 = vpop.f32.mrf.mxu0
        %v921 = vadd.f32 0.0, %v920
        %922 = vdwg.mxu0
        %923 = vmatpush.msra.mxu0 0.0
        %924 = vmatpush.msra.mxu0 0.0
        %925 = vmatpush.msra.mxu0 0.0
        %926 = vmatpush.msra.mxu0 0.0
        %927 = vmatpush.msra.mxu0 0.0
        %928 = vmatpush.msra.mxu0 0.0
        %929 = vmatpush.msra.mxu0 0.0
        %930 = vmatpush.msra.mxu0 0.0
        %931 = vmatpush.msra.mxu0 0.0
        %932 = vmatpush.msra.mxu0 0.0
        %933 = vmatpush.msra.mxu0 0.0
        %934 = vmatpush.msra.mxu0 0.0
        %935 = vmatpush.msra.mxu0 0.0
        %936 = vmatpush.msra.mxu0 0.0
        %937 = vmatpush.msra.mxu0 %v196
        %938 = vmatpush.msra.mxu0 %v188
        %939 = vmatmul.f32.gmra.mxu0 %v872
        %v940 = vpop.f32.mrf.mxu0
        %v941 = vadd.f32 0.0, %v940
        %942 = vmatmul.f32.gmra.mxu0 %v875
        %v943 = vpop.f32.mrf.mxu0
        %v944 = vadd.f32 0.0, %v943
        %945 = vdwg.mxu0
        %946 = vmatpush.msra.mxu0 0.0
        %947 = vmatpush.msra.mxu0 0.0
        %948 = vmatpush.msra.mxu0 0.0
        %949 = vmatpush.msra.mxu0 0.0
        %950 = vmatpush.msra.mxu0 0.0
        %951 = vmatpush.msra.mxu0 0.0
        %952 = vmatpush.msra.mxu0 0.0
        %953 = vmatpush.msra.mxu0 0.0
        %954 = vmatpush.msra.mxu0 0.0
        %955 = vmatpush.msra.mxu0 0.0
        %956 = vmatpush.msra.mxu0 0.0
        %957 = vmatpush.msra.mxu0 0.0
        %958 = vmatpush.msra.mxu0 0.0
        %959 = vmatpush.msra.mxu0 0.0
        %960 = vmatpush.msra.mxu0 %v197
        %961 = vmatpush.msra.mxu0 %v189
        %962 = vmatmul.f32.gmra.mxu0 %v872
        %v963 = vpop.f32.mrf.mxu0
        %v964 = vadd.f32 0.0, %v963
        %965 = vmatmul.f32.gmra.mxu0 %v875
        %v966 = vpop.f32.mrf.mxu0
        %v967 = vadd.f32 0.0, %v966
        %968 = vdwg.mxu0
        %969 = vmatpush.msra.mxu0 0.0
        %970 = vmatpush.msra.mxu0 0.0
        %971 = vmatpush.msra.mxu0 0.0
        %972 = vmatpush.msra.mxu0 0.0
        %973 = vmatpush.msra.mxu0 0.0
        %974 = vmatpush.msra.mxu0 0.0
        %975 = vmatpush.msra.mxu0 0.0
        %976 = vmatpush.msra.mxu0 0.0
        %977 = vmatpush.msra.mxu0 0.0
        %978 = vmatpush.msra.mxu0 0.0
        %979 = vmatpush.msra.mxu0 0.0
        %980 = vmatpush.msra.mxu0 0.0
        %981 = vmatpush.msra.mxu0 0.0
        %982 = vmatpush.msra.mxu0 0.0
        %983 = vmatpush.msra.mxu0 %v198
        %984 = vmatpush.msra.mxu0 %v190
        %985 = vmatmul.f32.gmra.mxu0 %v872
        %v986 = vpop.f32.mrf.mxu0
        %v987 = vadd.f32 0.0, %v986
        %988 = vmatmul.f32.gmra.mxu0 %v875
        %v989 = vpop.f32.mrf.mxu0
        %v990 = vadd.f32 0.0, %v989
        %991 = vdwg.mxu0
        %992 = vmatpush.msra.mxu0 0.0
        %993 = vmatpush.msra.mxu0 0.0
        %994 = vmatpush.msra.mxu0 0.0
        %995 = vmatpush.msra.mxu0 0.0
        %996 = vmatpush.msra.mxu0 0.0
        %997 = vmatpush.msra.mxu0 0.0
        %998 = vmatpush.msra.mxu0 0.0
        %999 = vmatpush.msra.mxu0 0.0
        %1000 = vmatpush.msra.mxu0 0.0
        %1001 = vmatpush.msra.mxu0 0.0
        %1002 = vmatpush.msra.mxu0 0.0
        %1003 = vmatpush.msra.mxu0 0.0
        %1004 = vmatpush.msra.mxu0 0.0
        %1005 = vmatpush.msra.mxu0 0.0
        %1006 = vmatpush.msra.mxu0 %v199
        %1007 = vmatpush.msra.mxu0 %v191
        %1008 = vmatmul.f32.gmra.mxu0 %v872
        %v1009 = vpop.f32.mrf.mxu0
        %v1010 = vadd.f32 0.0, %v1009
        %1011 = vmatmul.f32.gmra.mxu0 %v875
        %v1012 = vpop.f32.mrf.mxu0
        %v1013 = vadd.f32 0.0, %v1012
        %1014 = vdwg.mxu0
        %1015 = vmatpush.msra.mxu0 0.0
        %1016 = vmatpush.msra.mxu0 0.0
        %1017 = vmatpush.msra.mxu0 0.0
        %1018 = vmatpush.msra.mxu0 0.0
        %1019 = vmatpush.msra.mxu0 0.0
        %1020 = vmatpush.msra.mxu0 0.0
        %1021 = vmatpush.msra.mxu0 0.0
        %1022 = vmatpush.msra.mxu0 0.0
        %1023 = vmatpush.msra.mxu0 0.0
        %1024 = vmatpush.msra.mxu0 0.0
        %1025 = vmatpush.msra.mxu0 0.0
        %1026 = vmatpush.msra.mxu0 0.0
        %1027 = vmatpush.msra.mxu0 0.0
        %1028 = vmatpush.msra.mxu0 0.0
        %1029 = vmatpush.msra.mxu0 %v200
        %1030 = vmatpush.msra.mxu0 %v192
        %1031 = vmatmul.f32.gmra.mxu0 %v872
        %v1032 = vpop.f32.mrf.mxu0
        %v1033 = vadd.f32 0.0, %v1032
        %1034 = vmatmul.f32.gmra.mxu0 %v875
        %v1035 = vpop.f32.mrf.mxu0
        %v1036 = vadd.f32 0.0, %v1035
        %1037 = vdwg.mxu0
        %1038 = vmatpush.msra.mxu0 0.0
        %1039 = vmatpush.msra.mxu0 0.0
        %1040 = vmatpush.msra.mxu0 0.0
        %1041 = vmatpush.msra.mxu0 0.0
        %1042 = vmatpush.msra.mxu0 0.0
        %1043 = vmatpush.msra.mxu0 0.0
        %1044 = vmatpush.msra.mxu0 0.0
        %1045 = vmatpush.msra.mxu0 0.0
        %1046 = vmatpush.msra.mxu0 0.0
        %1047 = vmatpush.msra.mxu0 0.0
        %1048 = vmatpush.msra.mxu0 0.0
        %1049 = vmatpush.msra.mxu0 0.0
        %1050 = vmatpush.msra.mxu0 0.0
        %1051 = vmatpush.msra.mxu0 0.0
        %1052 = vmatpush.msra.mxu0 %v201
        %1053 = vmatpush.msra.mxu0 %v193
        %1054 = vmatmul.f32.gmra.mxu0 %v872
        %v1055 = vpop.f32.mrf.mxu0
        %v1056 = vadd.f32 0.0, %v1055
        %1057 = vmatmul.f32.gmra.mxu0 %v875
        %v1058 = vpop.f32.mrf.mxu0
        %v1059 = vadd.f32 0.0, %v1058
        %1060 = vdwg.mxu0
        %1061 = vst [vmem:[%s178 + $0xc0] sm:$0xff] %v895
        %1062 = vst [vmem:[%s178 + $0xc8] sm:$0xff] %v918
        %1063 = vst [vmem:[%s178 + $0xd0] sm:$0xff] %v941
        %1064 = vst [vmem:[%s178 + $0xd8] sm:$0xff] %v964
        %1065 = vst [vmem:[%s178 + $0xe0] sm:$0xff] %v987
        %1066 = vst [vmem:[%s178 + $0xe8] sm:$0xff] %v1010
        %1067 = vst [vmem:[%s178 + $0xf0] sm:$0xff] %v1033
        %1068 = vst [vmem:[%s178 + $0xf8] sm:$0xff] %v1056
        %1069 = vst [vmem:[%s178 + $0x1c0] sm:$0xff] %v898
        %1070 = vst [vmem:[%s178 + $0x1c8] sm:$0xff] %v921
        %1071 = vst [vmem:[%s178 + $0x1d0] sm:$0xff] %v944
        %1072 = vst [vmem:[%s178 + $0x1d8] sm:$0xff] %v967
        %1073 = vst [vmem:[%s178 + $0x1e0] sm:$0xff] %v990
        %1074 = vst [vmem:[%s178 + $0x1e8] sm:$0xff] %v1013
        %1075 = vst [vmem:[%s178 + $0x1f0] sm:$0xff] %v1036
        %1076 = vst [vmem:[%s178 + $0x1f8] sm:$0xff] %v1059
        %s1077 = sand.u32 %s79, 1
        %s1078 = scalar_lea.sflag [#allocation4], %s1077
        %s1079 = sand.u32 %s79, 1
        %s1080 = smul.addr %s1079, 512
        %s1081 = scalar_lea.vmem [#allocation5], %s1080
        // Predicated region
        $region33: #{tpu_custom_call.1} parent=27 // pred_check
          %p1082 = pneg %p89
        $region34: #{tpu_custom_call.1} parent=27 // pred_check_branch
          %1084 = sbr.rel (%p1082) target = $region36
        $region35: #{tpu_custom_call.1} parent=27 // pred_region
          %1086 = vsyncadd %s1078, 0
          %s1087 = smul.addr %s19, 64
          %s1088 = smul.addr %s1087, 8
          %s1089 = scalar_lea.hbm %s2, %s1088
          %s1090 = sshll.u32 %s1081, 4
          %s1091 = int_to_ptr.vmem [resolvable:$true] %s1090
          %s1092 = sshll.u32 %s1089, 4
          %s1093 = int_to_ptr.hbm [resolvable:$true] %s1092
          %1098 = dma.vmem_to_hbm [thread:$0]  %s1091, 8192, %s1093, %s1078, 4096, 4096, 256
        $region36: #{tpu_custom_call.1} parent=27 // pred_fallthru
          _
      $region28: #{tpu_custom_call.1} parent=5 // pred_fallthru
        _
      %p1099 = scmp.le.s32.totalorder 2, %s14
      // Predicated region
      $region37: #{tpu_custom_call.1} parent=5 // pred_check
        %p1100 = pneg %p1099
      $region38: #{tpu_custom_call.1} parent=5 // pred_check_branch
        %1102 = sbr.rel (%p1100) target = $region40
      $region39: #{tpu_custom_call.1} parent=5 // pred_region
        %s1103 = ssub.s32 %s14, 2
        // Predicated region
        $region41: #{tpu_custom_call.1} parent=39 // pred_check
          %p1104 = pneg %p95
        $region42: #{tpu_custom_call.1} parent=39 // pred_check_branch
          %1106 = sbr.rel (%p1104) target = $region44
        $region43: #{tpu_custom_call.1} parent=39 // pred_region
          %s1107 = sand.u32 %s80, 1
          %s1108 = scalar_lea.sflag [#allocation4], %s1107
          %s1109 = sand.u32 %s80, 1
          %s1110 = smul.addr %s1109, 512
          %s1111 = scalar_lea.vmem [#allocation5], %s1110
          %1113 = dma.done %s1108, 8192
        $region44: #{tpu_custom_call.1} parent=39 // pred_fallthru
          _
      $region40: #{tpu_custom_call.1} parent=5 // pred_fallthru
        _
    $region6: #{tpu_custom_call.1} parent=1 // loop_footer
      %s18 = sadd.s32 1, %s14
    $region7: #{tpu_custom_call.1} parent=1 // loop_footer_branch
      %13 = sbr.rel target = $region3
    $region8: #{tpu_custom_call.1} parent=1 // loop_exit
      _
    %1114 = vsyncpa [#allocation3], 1
    %s1115 = scalar_lea.sflag [#allocation3], 1
    %1116 = vsyncpa %s1115, 1
    %1117 = vsyncpa [#allocation4], 1
    %s1118 = scalar_lea.sflag [#allocation4], 1
    %1119 = vsyncpa %s1118, 1

</llo_original>
